<compile_context>
chip_gen: v6e
topology: v6e:2x2x1
jax: 0.10.0
libtpu: 0.0.40
codegen_flags: <defaults>
</compile_context>

<pallas_src>
import functools

import jax
import jax.numpy as jnp
from jax.experimental import pallas as pl
from jax.experimental.pallas import tpu as pltpu


def _round_up(x, m):
    return ((x + m - 1) // m) * m


def mlp_pde_kernel(x_ref, w1_ref, b1_ref, w2_ref, b2_ref, w3_ref, b3_ref, o_ref):
    # x_ref: (2, TM)  -- batch on the lane axis.
    x0 = x_ref[0:1, :]                                      # (1, TM)
    x1 = x_ref[1:2, :]                                      # (1, TM)

    # Layer 1 (in=2): VPU broadcast multiply-adds instead of a K=2 MXU matmul.
    # TODO(synk): if the bundle dump shows tanh expanding on VALU instead of the
    # EUP transcendental slot, re-express as 1 - 2/(exp(2x)+1) with exact
    # pl.reciprocal; likewise layer-1/head could move to the (mostly idle) MXU.
    h1 = jnp.tanh(
        w1_ref[:, 0:1] * x0 + w1_ref[:, 1:2] * x1 + b1_ref[...]
    )                                                       # (50, TM)

    # Layer 2 (50x50): the single real MXU matmul; N-dim = TM keeps the MXU busy.
    h2 = jnp.tanh(
        jnp.dot(w2_ref[...], h1, preferred_element_type=jnp.float32) + b2_ref[...]
    )                                                       # (50, TM)

    # Head (50 -> 1): VPU multiply + cross-sublane reduce (XLU), not a width-1 matmul.
    o_ref[...] = (
        jnp.sum(w3_ref[...] * h2, axis=0, keepdims=True) + b3_ref[...]
    )                                                       # (1, TM) lane-dense


@functools.partial(jax.jit, static_argnames=("tm",))
def neural_net_pde_forward(xt, params, *, tm=4096):
    """xt: (N, 2) float32. Returns (N, 1) float32."""
    w1, b1, w2, b2, w3, b3 = params
    N, D = xt.shape
    assert D == 2

    # --- Tile-size selection (static, shape-driven) -------------------------
    # Large batch tile to amortize per-grid-step pipeline overhead, but keep
    # >= 2 grid steps whenever the batch allows so the "parallel" axis can be
    # sharded across both v7x TensorCores.  All tiles are multiples of 128
    # (lane-dense output).
    n128 = _round_up(N, 128)
    tm_req = max(128, _round_up(tm, 128))
    num_tiles = max(1, pl.cdiv(n128, tm_req))
    if n128 >= 256:
        num_tiles = max(num_tiles, 2)
    tm_eff = _round_up(pl.cdiv(n128, num_tiles), 128)
    n_pad = tm_eff * num_tiles

    # Put the batch on the lane axis: kernel works on (feature, batch) columns.
    # Under jit the transpose + pad fuse into a single HBM copy.
    x_t = jnp.transpose(xt)                                 # (2, N)
    if n_pad != N:
        x_t = jnp.pad(x_t, ((0, 0), (0, n_pad - N)))

    def full(a):
        nd = a.ndim
        return pl.BlockSpec(a.shape, lambda i, _nd=nd: (0,) * _nd)

    out = pl.pallas_call(
        mlp_pde_kernel,
        out_shape=jax.ShapeDtypeStruct((1, n_pad), jnp.float32),
        grid_spec=pltpu.PrefetchScalarGridSpec(
            num_scalar_prefetch=0,
            grid=(num_tiles,),
            in_specs=[
                pl.BlockSpec((2, tm_eff), lambda i: (0, i)),   # x tile (lanes = batch)
                full(w1), full(b1),
                full(w2), full(b2),
                full(w3), full(b3),
            ],
            out_specs=pl.BlockSpec((1, tm_eff), lambda i: (0, i)),
        ),
        compiler_params=pltpu.CompilerParams(
            dimension_semantics=("parallel",),
        ),
    )(x_t, w1, b1, w2, b2, w3, b3)

    return out[0, :N].reshape(N, 1)


def init_params(key):
    """PyTorch-style init. Weights stored (out, in); biases as (out, 1) columns;
    the last layer's weight is stored as a (50, 1) column (== W3.T)."""
    ks = jax.random.split(key, 6)

    def linear(kw, kb, fan_in, fan_out):
        bound = 1.0 / jnp.sqrt(jnp.float32(fan_in))
        w = jax.random.uniform(kw, (fan_out, fan_in), jnp.float32, -bound, bound)
        b = jax.random.uniform(kb, (fan_out, 1), jnp.float32, -bound, bound)
        return w, b

    w1, b1 = linear(ks[0], ks[1], 2, 50)     # (50, 2), (50, 1)
    w2, b2 = linear(ks[2], ks[3], 50, 50)    # (50, 50), (50, 1)
    w3, b3 = linear(ks[4], ks[5], 50, 1)     # (1, 50), (1, 1)
    return (w1, b1, w2, b2, jnp.transpose(w3), b3)   # w3 stored as (50, 1)


def reference_forward(xt, params):
    # Plain XLA reference matching torch semantics: y = x @ W.T + b.
    w1, b1, w2, b2, w3, b3 = params
    h1 = jnp.tanh(xt @ w1.T + b1.T)          # (N, 50)
    h2 = jnp.tanh(h1 @ w2.T + b2.T)          # (N, 50)
    return h2 @ w3 + b3                      # (N, 1)  (w3 already (50, 1))


if __name__ == "__main__":
    key = jax.random.PRNGKey(0)
    kx, kp = jax.random.split(key)

    N = 300  # deliberately not a tile multiple: exercises padding + 2-tile grid
    xt = jax.random.normal(kx, (N, 2), dtype=jnp.float32)
    params = init_params(kp)

    out = jax.block_until_ready(neural_net_pde_forward(xt, params))

    ref = reference_forward(xt, params)
    assert out.shape == (N, 1)
    assert jnp.allclose(out, ref, atol=1e-4, rtol=1e-4)

    print("KERNEL_OK")
</pallas_src>

<mosaic_0001>
module attributes {stable_mosaic.version = 11 : i64} {
  func.func @mlp_pde_kernel(%arg0: i32, %arg1: memref<2x256xf32, #tpu.memory_space<vmem>>, %arg2: memref<50x2xf32, #tpu.memory_space<vmem>>, %arg3: memref<50x1xf32, #tpu.memory_space<vmem>>, %arg4: memref<50x50xf32, #tpu.memory_space<vmem>>, %arg5: memref<50x1xf32, #tpu.memory_space<vmem>>, %arg6: memref<50x1xf32, #tpu.memory_space<vmem>>, %arg7: memref<1x1xf32, #tpu.memory_space<vmem>>, %arg8: memref<1x256xf32, #tpu.memory_space<vmem>>) attributes {dimension_semantics = [#tpu.dimension_semantics<parallel>], iteration_bounds = array<i64: 2>, scalar_prefetch = 0 : i64, scratch_operands = 0 : i64, tpu.core_type = #tpu.core_type<tc>, window_params = [{transform_indices = @transform_0, window_bounds = array<i64: 2, 256>}, {pipeline_mode = #tpu.pipeline_mode<synchronous>, transform_indices = @transform_1, window_bounds = array<i64: 50, 2>}, {pipeline_mode = #tpu.pipeline_mode<synchronous>, transform_indices = @transform_2, window_bounds = array<i64: 50, 1>}, {pipeline_mode = #tpu.pipeline_mode<synchronous>, transform_indices = @transform_3, window_bounds = array<i64: 50, 50>}, {pipeline_mode = #tpu.pipeline_mode<synchronous>, transform_indices = @transform_4, window_bounds = array<i64: 50, 1>}, {pipeline_mode = #tpu.pipeline_mode<synchronous>, transform_indices = @transform_5, window_bounds = array<i64: 50, 1>}, {pipeline_mode = #tpu.pipeline_mode<synchronous>, transform_indices = @transform_6, window_bounds = array<i64: 1, 1>}, {transform_indices = @transform_7, window_bounds = array<i64: 1, 256>}]} {
    %c0 = arith.constant 0 : index
    %c0_0 = arith.constant 0 : index
    %0 = vector.load %arg1[%c0, %c0_0] : memref<2x256xf32, #tpu.memory_space<vmem>>, vector<1x256xf32>
    %c1 = arith.constant 1 : index
    %c0_1 = arith.constant 0 : index
    %1 = vector.load %arg1[%c1, %c0_1] : memref<2x256xf32, #tpu.memory_space<vmem>>, vector<1x256xf32>
    %c0_2 = arith.constant 0 : index
    %c0_3 = arith.constant 0 : index
    %2 = vector.load %arg2[%c0_2, %c0_3] : memref<50x2xf32, #tpu.memory_space<vmem>>, vector<50x1xf32>
    %3 = vector.broadcast %2 : vector<50x1xf32> to vector<50x256xf32>
    %4 = vector.broadcast %0 : vector<1x256xf32> to vector<50x256xf32>
    %5 = arith.mulf %3, %4 : vector<50x256xf32>
    %c0_4 = arith.constant 0 : index
    %c1_5 = arith.constant 1 : index
    %6 = vector.load %arg2[%c0_4, %c1_5] : memref<50x2xf32, #tpu.memory_space<vmem>>, vector<50x1xf32>
    %7 = vector.broadcast %6 : vector<50x1xf32> to vector<50x256xf32>
    %8 = vector.broadcast %1 : vector<1x256xf32> to vector<50x256xf32>
    %9 = arith.mulf %7, %8 : vector<50x256xf32>
    %10 = arith.addf %5, %9 : vector<50x256xf32>
    %c0_6 = arith.constant 0 : index
    %c0_7 = arith.constant 0 : index
    %11 = vector.load %arg3[%c0_6, %c0_7] : memref<50x1xf32, #tpu.memory_space<vmem>>, vector<50x1xf32>
    %12 = vector.broadcast %11 : vector<50x1xf32> to vector<50x256xf32>
    %13 = arith.addf %10, %12 : vector<50x256xf32>
    %14 = math.tanh %13 : vector<50x256xf32>
    %c0_8 = arith.constant 0 : index
    %c0_9 = arith.constant 0 : index
    %15 = vector.load %arg4[%c0_8, %c0_9] : memref<50x50xf32, #tpu.memory_space<vmem>>, vector<50x50xf32>
    %cst = arith.constant dense<0.000000e+00> : vector<50x256xf32>
    %16 = tpu.matmul %15, %14, %cst {dimension_numbers = #tpu.dot_dimension_numbers<[1], [0], [0], [1], [0, 0, 1, 1], [], []>} : vector<50x50xf32>, vector<50x256xf32>, vector<50x256xf32> -> vector<50x256xf32>
    %c0_10 = arith.constant 0 : index
    %c0_11 = arith.constant 0 : index
    %17 = vector.load %arg5[%c0_10, %c0_11] : memref<50x1xf32, #tpu.memory_space<vmem>>, vector<50x1xf32>
    %18 = vector.broadcast %17 : vector<50x1xf32> to vector<50x256xf32>
    %19 = arith.addf %16, %18 : vector<50x256xf32>
    %20 = math.tanh %19 : vector<50x256xf32>
    %c0_12 = arith.constant 0 : index
    %c0_13 = arith.constant 0 : index
    %21 = vector.load %arg6[%c0_12, %c0_13] : memref<50x1xf32, #tpu.memory_space<vmem>>, vector<50x1xf32>
    %22 = vector.broadcast %21 : vector<50x1xf32> to vector<50x256xf32>
    %23 = arith.mulf %22, %20 : vector<50x256xf32>
    %cst_14 = arith.constant dense<0.000000e+00> : vector<256xf32>
    %24 = vector.multi_reduction <add>, %23, %cst_14 [0] : vector<50x256xf32> to vector<256xf32>
    %25 = vector.shape_cast %24 : vector<256xf32> to vector<1x256xf32>
    %c0_15 = arith.constant 0 : index
    %c0_16 = arith.constant 0 : index
    %26 = vector.load %arg7[%c0_15, %c0_16] : memref<1x1xf32, #tpu.memory_space<vmem>>, vector<1x1xf32>
    %27 = vector.broadcast %26 : vector<1x1xf32> to vector<1x256xf32>
    %28 = arith.addf %25, %27 : vector<1x256xf32>
    %c0_17 = arith.constant 0 : index
    %c0_18 = arith.constant 0 : index
    %29 = vector.load %arg8[%c0_17, %c0_18] : memref<1x256xf32, #tpu.memory_space<vmem>>, vector<1x256xf32>
    tpu.vector_store %arg8[%c0_17, %c0_18], %28 {strides = array<i32>} : memref<1x256xf32, #tpu.memory_space<vmem>>, vector<1x256xf32>,
    return
  }
  func.func @transform_0(%arg0: i32) -> (i32, i32) {
    %c0_i32 = arith.constant 0 : i32
    %c0_i32_0 = arith.constant 0 : i32
    return %c0_i32, %arg0 : i32, i32
  }
  func.func @transform_1(%arg0: i32) -> (i32, i32) {
    %c0_i32 = arith.constant 0 : i32
    %c0_i32_0 = arith.constant 0 : i32
    %c0_i32_1 = arith.constant 0 : i32
    return %c0_i32, %c0_i32_0 : i32, i32
  }
  func.func @transform_2(%arg0: i32) -> (i32, i32) {
    %c0_i32 = arith.constant 0 : i32
    %c0_i32_0 = arith.constant 0 : i32
    %c0_i32_1 = arith.constant 0 : i32
    return %c0_i32, %c0_i32_0 : i32, i32
  }
  func.func @transform_3(%arg0: i32) -> (i32, i32) {
    %c0_i32 = arith.constant 0 : i32
    %c0_i32_0 = arith.constant 0 : i32
    %c0_i32_1 = arith.constant 0 : i32
    return %c0_i32, %c0_i32_0 : i32, i32
  }
  func.func @transform_4(%arg0: i32) -> (i32, i32) {
    %c0_i32 = arith.constant 0 : i32
    %c0_i32_0 = arith.constant 0 : i32
    %c0_i32_1 = arith.constant 0 : i32
    return %c0_i32, %c0_i32_0 : i32, i32
  }
  func.func @transform_5(%arg0: i32) -> (i32, i32) {
    %c0_i32 = arith.constant 0 : i32
    %c0_i32_0 = arith.constant 0 : i32
    %c0_i32_1 = arith.constant 0 : i32
    return %c0_i32, %c0_i32_0 : i32, i32
  }
  func.func @transform_6(%arg0: i32) -> (i32, i32) {
    %c0_i32 = arith.constant 0 : i32
    %c0_i32_0 = arith.constant 0 : i32
    %c0_i32_1 = arith.constant 0 : i32
    return %c0_i32, %c0_i32_0 : i32, i32
  }
  func.func @transform_7(%arg0: i32) -> (i32, i32) {
    %c0_i32 = arith.constant 0 : i32
    %c0_i32_0 = arith.constant 0 : i32
    return %c0_i32, %arg0 : i32, i32
  }
}

</mosaic_0001>

<llo_original>
// kernel: neural_net_pde_forward.1
$region0: #{neural_net_pde_forward.1}
  #allocation0 [shape = 'u32[]', space=smem, size = 0x4, offset = 0x4, fixed_abs, tag = 'smem constant byte address 0x4 - core index']
  #allocation1 [shape = 'u32[144,128]{1,0:T(1,128)}', space=vmem, size = 0x12000, scoped, tag = 'internal scratch']
  #allocation2 [shape = 'f32[1,1]{1,0:T(1,128)S(1)}', space=vmem, size = 0x200, scoped, tag = 'scoped memory for neural_net_pde_forward.1']
  %s0 = inlined_call_operand.vmem [shape: f32[2,512], index: 0, kind: input, shape index: {}]
  %s1 = inlined_call_operand.vmem [shape: f32[50,2], index: 1, kind: input, shape index: {}]
  %s2 = inlined_call_operand.vmem [shape: f32[50,1], index: 2, kind: input, shape index: {}]
  %s3 = inlined_call_operand.vmem [shape: f32[50,50], index: 3, kind: input, shape index: {}]
  %s4 = inlined_call_operand.vmem [shape: f32[50,1], index: 4, kind: input, shape index: {}]
  %s5 = inlined_call_operand.vmem [shape: f32[50,1], index: 5, kind: input, shape index: {}]
  %s6 = inlined_call_operand.<no memory space> [shape: f32[1,1], index: 6, kind: input, shape index: {}]
  %s7 = inlined_call_operand.vmem [shape: f32[1,512], index: 7, kind: output, shape index: {}]
  %s8 = sld [smem:[#allocation0]]
  $region61: #{neural_net_pde_forward.1} parent=0
    _
  %s10 = ssub.s32 1, %s8
  %s11 = scalar_select 0, %s10, %s8
  %v12 = vstv %s6
  %13 = vst [vmem:[#allocation2] sm:$0x1] %v12
  loop: start=0, step=1, limit=4
  $region2: #{neural_net_pde_forward.1} parent=0 // loop_pre_header
    _
  $region3: #{neural_net_pde_forward.1} parent=0 // loop_header
    %s15 = sphi 0, %s19
    %p16 = scmp.ge.s32.totalorder %s15, 4
    %s25 = sphi 0, %s27
    %s28 = sphi 0, %s25
    %s29 = sphi 0, %s28
    %s45 = sphi 0, %s29
    %s49 = sphi 0, %s49
    %s51 = sphi 0, %s49
    %s52 = sphi 0, %s51
    %s66 = sphi 0, %s52
    %s70 = sphi 0, %s70
    %s72 = sphi 0, %s70
    %s73 = sphi 0, %s72
    %s87 = sphi 0, %s73
    %s91 = sphi 0, %s91
    %s93 = sphi 0, %s91
    %s94 = sphi 0, %s93
    %s108 = sphi 0, %s94
    %s112 = sphi 0, %s112
    %s114 = sphi 0, %s112
    %s115 = sphi 0, %s114
    %s129 = sphi 0, %s115
    %s133 = sphi 0, %s133
    %s135 = sphi 0, %s133
    %s136 = sphi 0, %s135
    %s150 = sphi 0, %s136
    %s154 = sphi 0, %s154
    %s156 = sphi 0, %s154
    %s157 = sphi 0, %s156
    %s171 = sphi 0, %s157
    %s177 = sphi 0, %s179
    %s180 = sphi 0, %s177
    %s181 = sphi 0, %s180
    %s197 = sphi 0, %s181
  $region4: #{neural_net_pde_forward.1} parent=0 // loop_header_branch
    %18 = sbr.rel (%p16) target = $region8
  $region5: #{neural_net_pde_forward.1} parent=0 // loop_body
    %s20 = ssub.s32 %s15, 1
    %s21 = ssub.s32 %s15, 2
    %s22 = sadd.s32 %s15, 1
    %s23 = ssub.s32 %s15, %s22
    %p24 = scmp.eq.s32.totalorder %s23, 0
    %s26 = sadd.s32 %s25, 1
    %s27 = scalar_select %p24, %s25, %s26
    %p30 = pneg %p24
    %p31 = scmp.eq.s32.totalorder %s15, 1
    %p32 = por %p30, %p31
    %p33 = scmp.ne.s32.totalorder %s25, %s28
    %p34 = scmp.eq.s32.totalorder %s15, 0
    %p35 = por %p33, %p34
    %p36 = scmp.ne.s32.totalorder %s25, %s28
    %p37 = scmp.eq.s32.totalorder %s20, 1
    %p38 = por %p36, %p37
    %p39 = scmp.ne.s32.totalorder %s28, %s29
    %p40 = scmp.eq.s32.totalorder %s20, 0
    %p41 = por %p39, %p40
    %p42 = scmp.ne.s32.totalorder %s28, %s29
    %p43 = scmp.eq.s32.totalorder %s21, 1
    %p44 = por %p42, %p43
    %p46 = scmp.ne.s32.totalorder %s29, %s45
    %p47 = scmp.eq.s32.totalorder %s21, 0
    %p48 = por %p46, %p47
    %s50 = sadd.s32 %s49, 1
    %p53 = scmp.eq.s32.totalorder %s15, 1
    %p54 = scmp.ne.s32.totalorder %s49, %s51
    %p55 = scmp.eq.s32.totalorder %s15, 0
    %p56 = por %p54, %p55
    %p57 = scmp.ne.s32.totalorder %s49, %s51
    %p58 = scmp.eq.s32.totalorder %s20, 1
    %p59 = por %p57, %p58
    %p60 = scmp.ne.s32.totalorder %s51, %s52
    %p61 = scmp.eq.s32.totalorder %s20, 0
    %p62 = por %p60, %p61
    %p63 = scmp.ne.s32.totalorder %s51, %s52
    %p64 = scmp.eq.s32.totalorder %s21, 1
    %p65 = por %p63, %p64
    %p67 = scmp.ne.s32.totalorder %s52, %s66
    %p68 = scmp.eq.s32.totalorder %s21, 0
    %p69 = por %p67, %p68
    %s71 = sadd.s32 %s70, 1
    %p74 = scmp.eq.s32.totalorder %s15, 1
    %p75 = scmp.ne.s32.totalorder %s70, %s72
    %p76 = scmp.eq.s32.totalorder %s15, 0
    %p77 = por %p75, %p76
    %p78 = scmp.ne.s32.totalorder %s70, %s72
    %p79 = scmp.eq.s32.totalorder %s20, 1
    %p80 = por %p78, %p79
    %p81 = scmp.ne.s32.totalorder %s72, %s73
    %p82 = scmp.eq.s32.totalorder %s20, 0
    %p83 = por %p81, %p82
    %p84 = scmp.ne.s32.totalorder %s72, %s73
    %p85 = scmp.eq.s32.totalorder %s21, 1
    %p86 = por %p84, %p85
    %p88 = scmp.ne.s32.totalorder %s73, %s87
    %p89 = scmp.eq.s32.totalorder %s21, 0
    %p90 = por %p88, %p89
    %s92 = sadd.s32 %s91, 1
    %p95 = scmp.eq.s32.totalorder %s15, 1
    %p96 = scmp.ne.s32.totalorder %s91, %s93
    %p97 = scmp.eq.s32.totalorder %s15, 0
    %p98 = por %p96, %p97
    %p99 = scmp.ne.s32.totalorder %s91, %s93
    %p100 = scmp.eq.s32.totalorder %s20, 1
    %p101 = por %p99, %p100
    %p102 = scmp.ne.s32.totalorder %s93, %s94
    %p103 = scmp.eq.s32.totalorder %s20, 0
    %p104 = por %p102, %p103
    %p105 = scmp.ne.s32.totalorder %s93, %s94
    %p106 = scmp.eq.s32.totalorder %s21, 1
    %p107 = por %p105, %p106
    %p109 = scmp.ne.s32.totalorder %s94, %s108
    %p110 = scmp.eq.s32.totalorder %s21, 0
    %p111 = por %p109, %p110
    %s113 = sadd.s32 %s112, 1
    %p116 = scmp.eq.s32.totalorder %s15, 1
    %p117 = scmp.ne.s32.totalorder %s112, %s114
    %p118 = scmp.eq.s32.totalorder %s15, 0
    %p119 = por %p117, %p118
    %p120 = scmp.ne.s32.totalorder %s112, %s114
    %p121 = scmp.eq.s32.totalorder %s20, 1
    %p122 = por %p120, %p121
    %p123 = scmp.ne.s32.totalorder %s114, %s115
    %p124 = scmp.eq.s32.totalorder %s20, 0
    %p125 = por %p123, %p124
    %p126 = scmp.ne.s32.totalorder %s114, %s115
    %p127 = scmp.eq.s32.totalorder %s21, 1
    %p128 = por %p126, %p127
    %p130 = scmp.ne.s32.totalorder %s115, %s129
    %p131 = scmp.eq.s32.totalorder %s21, 0
    %p132 = por %p130, %p131
    %s134 = sadd.s32 %s133, 1
    %p137 = scmp.eq.s32.totalorder %s15, 1
    %p138 = scmp.ne.s32.totalorder %s133, %s135
    %p139 = scmp.eq.s32.totalorder %s15, 0
    %p140 = por %p138, %p139
    %p141 = scmp.ne.s32.totalorder %s133, %s135
    %p142 = scmp.eq.s32.totalorder %s20, 1
    %p143 = por %p141, %p142
    %p144 = scmp.ne.s32.totalorder %s135, %s136
    %p145 = scmp.eq.s32.totalorder %s20, 0
    %p146 = por %p144, %p145
    %p147 = scmp.ne.s32.totalorder %s135, %s136
    %p148 = scmp.eq.s32.totalorder %s21, 1
    %p149 = por %p147, %p148
    %p151 = scmp.ne.s32.totalorder %s136, %s150
    %p152 = scmp.eq.s32.totalorder %s21, 0
    %p153 = por %p151, %p152
    %s155 = sadd.s32 %s154, 1
    %p158 = scmp.eq.s32.totalorder %s15, 1
    %p159 = scmp.ne.s32.totalorder %s154, %s156
    %p160 = scmp.eq.s32.totalorder %s15, 0
    %p161 = por %p159, %p160
    %p162 = scmp.ne.s32.totalorder %s154, %s156
    %p163 = scmp.eq.s32.totalorder %s20, 1
    %p164 = por %p162, %p163
    %p165 = scmp.ne.s32.totalorder %s156, %s157
    %p166 = scmp.eq.s32.totalorder %s20, 0
    %p167 = por %p165, %p166
    %p168 = scmp.ne.s32.totalorder %s156, %s157
    %p169 = scmp.eq.s32.totalorder %s21, 1
    %p170 = por %p168, %p169
    %p172 = scmp.ne.s32.totalorder %s157, %s171
    %p173 = scmp.eq.s32.totalorder %s21, 0
    %p174 = por %p172, %p173
    %s175 = ssub.s32 %s15, %s22
    %p176 = scmp.eq.s32.totalorder %s175, 0
    %s178 = sadd.s32 %s177, 1
    %s179 = scalar_select %p176, %s177, %s178
    %p182 = pneg %p176
    %p183 = scmp.eq.s32.totalorder %s15, 1
    %p184 = por %p182, %p183
    %p185 = scmp.ne.s32.totalorder %s177, %s180
    %p186 = scmp.eq.s32.totalorder %s15, 0
    %p187 = por %p185, %p186
    %p188 = scmp.ne.s32.totalorder %s177, %s180
    %p189 = scmp.eq.s32.totalorder %s20, 1
    %p190 = por %p188, %p189
    %p191 = scmp.ne.s32.totalorder %s180, %s181
    %p192 = scmp.eq.s32.totalorder %s20, 0
    %p193 = por %p191, %p192
    %p194 = scmp.ne.s32.totalorder %s180, %s181
    %p195 = scmp.eq.s32.totalorder %s21, 1
    %p196 = por %p194, %p195
    %p198 = scmp.ne.s32.totalorder %s181, %s197
    %p199 = scmp.eq.s32.totalorder %s21, 0
    %p200 = por %p198, %p199
    %p201 = scmp.le.s32.totalorder 1, %s15
    %p202 = scmp.lt.s32.totalorder %s15, 3
    %p203 = pnand %p201, %p202
    %p204 = pneg %p203
    // Predicated region
    $region9: #{neural_net_pde_forward.1} parent=5 // pred_check
      _
    $region10: #{neural_net_pde_forward.1} parent=5 // pred_check_branch
      %206 = sbr.rel (%p203) target = $region12
    $region11: #{neural_net_pde_forward.1} parent=5 // pred_region
      %s207 = ssub.s32 %s15, 1
      // Predicated region
      $region13: #{neural_net_pde_forward.1} parent=11 // pred_check
        %p208 = pneg %p62
      $region14: #{neural_net_pde_forward.1} parent=11 // pred_check_branch
        %210 = sbr.rel (%p208) target = $region16
      $region15: #{neural_net_pde_forward.1} parent=11 // pred_region
        _
      $region16: #{neural_net_pde_forward.1} parent=11 // pred_fallthru
        _
      // Predicated region
      $region17: #{neural_net_pde_forward.1} parent=11 // pred_check
        %p211 = pneg %p83
      $region18: #{neural_net_pde_forward.1} parent=11 // pred_check_branch
        %213 = sbr.rel (%p211) target = $region20
      $region19: #{neural_net_pde_forward.1} parent=11 // pred_region
        _
      $region20: #{neural_net_pde_forward.1} parent=11 // pred_fallthru
        _
      // Predicated region
      $region21: #{neural_net_pde_forward.1} parent=11 // pred_check
        %p214 = pneg %p104
      $region22: #{neural_net_pde_forward.1} parent=11 // pred_check_branch
        %216 = sbr.rel (%p214) target = $region24
      $region23: #{neural_net_pde_forward.1} parent=11 // pred_region
        _
      $region24: #{neural_net_pde_forward.1} parent=11 // pred_fallthru
        _
      // Predicated region
      $region25: #{neural_net_pde_forward.1} parent=11 // pred_check
        %p217 = pneg %p125
      $region26: #{neural_net_pde_forward.1} parent=11 // pred_check_branch
        %219 = sbr.rel (%p217) target = $region28
      $region27: #{neural_net_pde_forward.1} parent=11 // pred_region
        _
      $region28: #{neural_net_pde_forward.1} parent=11 // pred_fallthru
        _
      // Predicated region
      $region29: #{neural_net_pde_forward.1} parent=11 // pred_check
        %p220 = pneg %p146
      $region30: #{neural_net_pde_forward.1} parent=11 // pred_check_branch
        %222 = sbr.rel (%p220) target = $region32
      $region31: #{neural_net_pde_forward.1} parent=11 // pred_region
        _
      $region32: #{neural_net_pde_forward.1} parent=11 // pred_fallthru
        _
      // Predicated region
      $region33: #{neural_net_pde_forward.1} parent=11 // pred_check
        %p223 = pneg %p167
      $region34: #{neural_net_pde_forward.1} parent=11 // pred_check_branch
        %225 = sbr.rel (%p223) target = $region36
      $region35: #{neural_net_pde_forward.1} parent=11 // pred_region
        _
      $region36: #{neural_net_pde_forward.1} parent=11 // pred_fallthru
        _
    $region12: #{neural_net_pde_forward.1} parent=5 // pred_fallthru
      _
    %p226 = scmp.lt.s32.totalorder %s15, 2
    // Predicated region
    $region37: #{neural_net_pde_forward.1} parent=5 // pred_check
      %p227 = pneg %p226
    $region38: #{neural_net_pde_forward.1} parent=5 // pred_check_branch
      %229 = sbr.rel (%p227) target = $region40
    $region39: #{neural_net_pde_forward.1} parent=5 // pred_region
      // Predicated region
      $region41: #{neural_net_pde_forward.1} parent=39 // pred_check
        %p230 = pneg %p35
      $region42: #{neural_net_pde_forward.1} parent=39 // pred_check_branch
        %232 = sbr.rel (%p230) target = $region44
      $region43: #{neural_net_pde_forward.1} parent=39 // pred_region
        %s233 = smul.u32 2, %s15
        %p234 = scmp.lt.s32.totalorder %s233, 3
        %s235 = scalar_select %p234, %s233, 3
        %s236 = smul.addr %s235, 2
        %s237 = scalar_lea.vmem %s0, %s236
        %s238 = smul.u32 2, %s15
      $region44: #{neural_net_pde_forward.1} parent=39 // pred_fallthru
        _
    $region40: #{neural_net_pde_forward.1} parent=5 // pred_fallthru
      _
    %p239 = scmp.le.s32.totalorder 1, %s15
    %p240 = scmp.lt.s32.totalorder %s15, 3
    %p241 = pnand %p239, %p240
    %p242 = pneg %p241
    // Predicated region
    $region45: #{neural_net_pde_forward.1} parent=5 // pred_check
      _
    $region46: #{neural_net_pde_forward.1} parent=5 // pred_check_branch
      %244 = sbr.rel (%p241) target = $region48
    $region47: #{neural_net_pde_forward.1} parent=5 // pred_region
      %s245 = ssub.s32 %s15, 1
      %s246 = smul.u32 2, %s20
      %p247 = scmp.lt.s32.totalorder %s246, 3
      %s248 = scalar_select %p247, %s246, 3
      %s249 = smul.addr %s248, 2
      %s250 = scalar_lea.vmem %s0, %s249
      %p251 = pneg %p41
      %p252 = pneg %p38
      %p253 = pneg %p62
      %p254 = pneg %p59
      %p255 = pneg %p83
      %p256 = pneg %p80
      %p257 = pneg %p104
      %p258 = pneg %p101
      %p259 = pneg %p125
      %p260 = pneg %p122
      %p261 = pneg %p146
      %p262 = pneg %p143
      %p263 = pneg %p167
      %p264 = pneg %p164
      %p265 = pneg %p193
      %p266 = pneg %p190
      %s267 = smul.u32 2, %s20
      %p268 = scmp.lt.s32.totalorder %s267, 3
      %s269 = scalar_select %p268, %s267, 3
      %s270 = scalar_lea.vmem %s7, %s269
      %s271 = smul.u32 2, %s20
      %p272 = scmp.lt.s32.totalorder %s271, 3
      %s273 = scalar_select %p272, %s271, 3
      %s274 = smul.addr %s273, 2
      %s275 = scalar_lea.vmem %s0, %s274
      %s276 = smul.u32 2, %s20
      %s277 = smul.u32 2, %s20
      %p278 = scmp.lt.s32.totalorder %s277, 3
      %s279 = scalar_select %p278, %s277, 3
      %s280 = scalar_lea.vmem %s7, %s279
      %s281 = smul.u32 2, %s20
      %v282 = vld [vmem:[%s275] ss:$2 sm:$0x3]
      %s283 = scalar_lea.vmem %s275, 1
      %v284 = vld [vmem:[%s283] ss:$2 sm:$0x3]
      %v285 = vld [vmem:[%s1] sm:$0xff]
      %v286 = vld [vmem:[%s1 + $0x8] sm:$0xff]
      %v287 = vld [vmem:[%s1 + $0x10] sm:$0xff]
      %v288 = vld [vmem:[%s1 + $0x18] sm:$0xff]
      %v289 = vld [vmem:[%s1 + $0x20] sm:$0xff]
      %v290 = vld [vmem:[%s1 + $0x28] sm:$0xff]
      %v291 = vld [vmem:[%s1 + $0x30] sm:$0x3]
      %293 = vset.pattern.permute.xlu0 0
      %294 = vperm.xlu0 %293, %v285
      %v295 = vpop.permute.xlu0 %294
      %298 = vset.pattern.permute.xlu0 0
      %299 = vperm.xlu0 %298, %v286
      %v300 = vpop.permute.xlu0 %299
      %303 = vset.pattern.permute.xlu0 0
      %304 = vperm.xlu0 %303, %v287
      %v305 = vpop.permute.xlu0 %304
      %308 = vset.pattern.permute.xlu0 0
      %309 = vperm.xlu0 %308, %v288
      %v310 = vpop.permute.xlu0 %309
      %313 = vset.pattern.permute.xlu0 0
      %314 = vperm.xlu0 %313, %v289
      %v315 = vpop.permute.xlu0 %314
      %318 = vset.pattern.permute.xlu0 0
      %319 = vperm.xlu0 %318, %v290
      %v320 = vpop.permute.xlu0 %319
      %323 = vset.pattern.permute.xlu0 0
      %324 = vperm.xlu0 %323, %v291
      %v325 = vpop.permute.xlu0 %324
      %v328 = vlaneseq
      %v329 = vshrl.u32 %v328, 7
      %v330 = vsub.s32 0, %v329
      %v331 = vrot.slane %v282, %v330
      %v332 = vlaneseq
      %v333 = vshrl.u32 %v332, 7
      %v334 = vsub.s32 1, %v333
      %v335 = vrot.slane %v282, %v334
      %v338 = vmul.f32 %v295, %v331
      %v339 = vmul.f32 %v295, %v335
      %v340 = vmul.f32 %v300, %v331
      %v341 = vmul.f32 %v300, %v335
      %v342 = vmul.f32 %v305, %v331
      %v343 = vmul.f32 %v305, %v335
      %v344 = vmul.f32 %v310, %v331
      %v345 = vmul.f32 %v310, %v335
      %v346 = vmul.f32 %v315, %v331
      %v347 = vmul.f32 %v315, %v335
      %v348 = vmul.f32 %v320, %v331
      %v349 = vmul.f32 %v320, %v335
      %v350 = vmul.f32 %v325, %v331
      %v351 = vmul.f32 %v325, %v335
      %352 = vset.pattern.permute.xlu0 1
      %353 = vperm.xlu0 %352, %v285
      %v354 = vpop.permute.xlu0 %353
      %356 = vset.pattern.permute.xlu0 1
      %357 = vperm.xlu0 %356, %v286
      %v358 = vpop.permute.xlu0 %357
      %360 = vset.pattern.permute.xlu0 1
      %361 = vperm.xlu0 %360, %v287
      %v362 = vpop.permute.xlu0 %361
      %364 = vset.pattern.permute.xlu0 1
      %365 = vperm.xlu0 %364, %v288
      %v366 = vpop.permute.xlu0 %365
      %368 = vset.pattern.permute.xlu0 1
      %369 = vperm.xlu0 %368, %v289
      %v370 = vpop.permute.xlu0 %369
      %372 = vset.pattern.permute.xlu0 1
      %373 = vperm.xlu0 %372, %v290
      %v374 = vpop.permute.xlu0 %373
      %376 = vset.pattern.permute.xlu0 1
      %377 = vperm.xlu0 %376, %v291
      %v378 = vpop.permute.xlu0 %377
      %v381 = vlaneseq
      %v382 = vshrl.u32 %v381, 7
      %v383 = vsub.s32 0, %v382
      %v384 = vrot.slane %v284, %v383
      %v385 = vlaneseq
      %v386 = vshrl.u32 %v385, 7
      %v387 = vsub.s32 1, %v386
      %v388 = vrot.slane %v284, %v387
      %v391 = vmul.f32 %v354, %v384
      %v392 = vmul.f32 %v354, %v388
      %v393 = vmul.f32 %v358, %v384
      %v394 = vmul.f32 %v358, %v388
      %v395 = vmul.f32 %v362, %v384
      %v396 = vmul.f32 %v362, %v388
      %v397 = vmul.f32 %v366, %v384
      %v398 = vmul.f32 %v366, %v388
      %v399 = vmul.f32 %v370, %v384
      %v400 = vmul.f32 %v370, %v388
      %v401 = vmul.f32 %v374, %v384
      %v402 = vmul.f32 %v374, %v388
      %v403 = vmul.f32 %v378, %v384
      %v404 = vmul.f32 %v378, %v388
      %v405 = vadd.f32 %v338, %v391
      %v406 = vadd.f32 %v339, %v392
      %v407 = vadd.f32 %v340, %v393
      %v408 = vadd.f32 %v341, %v394
      %v409 = vadd.f32 %v342, %v395
      %v410 = vadd.f32 %v343, %v396
      %v411 = vadd.f32 %v344, %v397
      %v412 = vadd.f32 %v345, %v398
      %v413 = vadd.f32 %v346, %v399
      %v414 = vadd.f32 %v347, %v400
      %v415 = vadd.f32 %v348, %v401
      %v416 = vadd.f32 %v349, %v402
      %v417 = vadd.f32 %v350, %v403
      %v418 = vadd.f32 %v351, %v404
      %v419 = vld [vmem:[%s2] sm:$0xff]
      %v420 = vld [vmem:[%s2 + $0x8] sm:$0xff]
      %v421 = vld [vmem:[%s2 + $0x10] sm:$0xff]
      %v422 = vld [vmem:[%s2 + $0x18] sm:$0xff]
      %v423 = vld [vmem:[%s2 + $0x20] sm:$0xff]
      %v424 = vld [vmem:[%s2 + $0x28] sm:$0xff]
      %v425 = vld [vmem:[%s2 + $0x30] sm:$0x3]
      %427 = vset.pattern.permute.xlu0 0
      %428 = vperm.xlu0 %427, %v419
      %v429 = vpop.permute.xlu0 %428
      %432 = vset.pattern.permute.xlu0 0
      %433 = vperm.xlu0 %432, %v420
      %v434 = vpop.permute.xlu0 %433
      %437 = vset.pattern.permute.xlu0 0
      %438 = vperm.xlu0 %437, %v421
      %v439 = vpop.permute.xlu0 %438
      %442 = vset.pattern.permute.xlu0 0
      %443 = vperm.xlu0 %442, %v422
      %v444 = vpop.permute.xlu0 %443
      %447 = vset.pattern.permute.xlu0 0
      %448 = vperm.xlu0 %447, %v423
      %v449 = vpop.permute.xlu0 %448
      %452 = vset.pattern.permute.xlu0 0
      %453 = vperm.xlu0 %452, %v424
      %v454 = vpop.permute.xlu0 %453
      %457 = vset.pattern.permute.xlu0 0
      %458 = vperm.xlu0 %457, %v425
      %v459 = vpop.permute.xlu0 %458
      %v461 = vadd.f32 %v405, %v429
      %v462 = vadd.f32 %v406, %v429
      %v463 = vadd.f32 %v407, %v434
      %v464 = vadd.f32 %v408, %v434
      %v465 = vadd.f32 %v409, %v439
      %v466 = vadd.f32 %v410, %v439
      %v467 = vadd.f32 %v411, %v444
      %v468 = vadd.f32 %v412, %v444
      %v469 = vadd.f32 %v413, %v449
      %v470 = vadd.f32 %v414, %v449
      %v471 = vadd.f32 %v415, %v454
      %v472 = vadd.f32 %v416, %v454
      %v473 = vadd.f32 %v417, %v459
      %v474 = vadd.f32 %v418, %v459
      %v475 = vtanh.pop %v461
      %v476 = vtanh.pop %v462
      %v477 = vtanh.pop %v463
      %v478 = vtanh.pop %v464
      %v479 = vtanh.pop %v465
      %v480 = vtanh.pop %v466
      %v481 = vtanh.pop %v467
      %v482 = vtanh.pop %v468
      %v483 = vtanh.pop %v469
      %v484 = vtanh.pop %v470
      %v485 = vtanh.pop %v471
      %v486 = vtanh.pop %v472
      %v487 = vtanh.pop %v473
      %v488 = vtanh.pop %v474
      %v489 = vld [vmem:[%s3] sm:$0xff]
      %v490 = vld [vmem:[%s3 + $0x8] sm:$0xff]
      %v491 = vld [vmem:[%s3 + $0x10] sm:$0xff]
      %v492 = vld [vmem:[%s3 + $0x18] sm:$0xff]
      %v493 = vld [vmem:[%s3 + $0x20] sm:$0xff]
      %v494 = vld [vmem:[%s3 + $0x28] sm:$0xff]
      %v495 = vld [vmem:[%s3 + $0x30] sm:$0x3]
      %v496 = vld [vmem:[%s4] sm:$0xff]
      %v497 = vld [vmem:[%s4 + $0x8] sm:$0xff]
      %v498 = vld [vmem:[%s4 + $0x10] sm:$0xff]
      %v499 = vld [vmem:[%s4 + $0x18] sm:$0xff]
      %v500 = vld [vmem:[%s4 + $0x20] sm:$0xff]
      %v501 = vld [vmem:[%s4 + $0x28] sm:$0xff]
      %v502 = vld [vmem:[%s4 + $0x30] sm:$0x3]
      %504 = vset.pattern.permute.xlu0 0
      %505 = vperm.xlu0 %504, %v496
      %v506 = vpop.permute.xlu0 %505
      %509 = vset.pattern.permute.xlu0 0
      %510 = vperm.xlu0 %509, %v497
      %v511 = vpop.permute.xlu0 %510
      %514 = vset.pattern.permute.xlu0 0
      %515 = vperm.xlu0 %514, %v498
      %v516 = vpop.permute.xlu0 %515
      %519 = vset.pattern.permute.xlu0 0
      %520 = vperm.xlu0 %519, %v499
      %v521 = vpop.permute.xlu0 %520
      %524 = vset.pattern.permute.xlu0 0
      %525 = vperm.xlu0 %524, %v500
      %v526 = vpop.permute.xlu0 %525
      %529 = vset.pattern.permute.xlu0 0
      %530 = vperm.xlu0 %529, %v501
      %v531 = vpop.permute.xlu0 %530
      %534 = vset.pattern.permute.xlu0 0
      %535 = vperm.xlu0 %534, %v502
      %v536 = vpop.permute.xlu0 %535
      %vm538 = vcmask 408576
      %v540 = vsel %vm538, %v489, 0
      %v543 = vsel %vm538, %v490, 0
      %v546 = vsel %vm538, %v491, 0
      %v549 = vsel %vm538, %v492, 0
      %v552 = vsel %vm538, %v493, 0
      %v555 = vsel %vm538, %v494, 0
      %v558 = vsel %vm538, %v495, 0
      %vm560 = vcmask 1041408
      %v562 = vsel %vm560, %v487, 0
      %v565 = vsel %vm560, %v488, 0
      %567 = vmatprep.subr.mxu0 0.0
      %568 = vmatpush1.msra.mxu0 0.0
      %569 = vmatprep.subr.mxu0 0.0
      %570 = vmatpush1.msra.mxu0 0.0
      %571 = vmatprep.subr.mxu0 0.0
      %572 = vmatpush1.msra.mxu0 0.0
      %573 = vmatprep.subr.mxu0 0.0
      %574 = vmatpush1.msra.mxu0 0.0
      %575 = vmatprep.subr.mxu0 0.0
      %576 = vmatpush1.msra.mxu0 0.0
      %577 = vmatprep.subr.mxu0 0.0
      %578 = vmatpush1.msra.mxu0 0.0
      %579 = vmatprep.subr.mxu0 0.0
      %580 = vmatpush1.msra.mxu0 0.0
      %581 = vmatprep.subr.mxu0 0.0
      %582 = vmatpush1.msra.mxu0 0.0
      %583 = vmatprep.subr.mxu0 0.0
      %584 = vmatpush1.msra.mxu0 0.0
      %585 = vmatprep.subr.mxu0 %v565
      %586 = vmatpush1.msra.mxu0 %v562
      %587 = vmatprep.subr.mxu0 %v486
      %588 = vmatpush1.msra.mxu0 %v485
      %589 = vmatprep.subr.mxu0 %v484
      %590 = vmatpush1.msra.mxu0 %v483
      %591 = vmatprep.subr.mxu0 %v482
      %592 = vmatpush1.msra.mxu0 %v481
      %593 = vmatprep.subr.mxu0 %v480
      %594 = vmatpush1.msra.mxu0 %v479
      %595 = vmatprep.subr.mxu0 %v478
      %596 = vmatpush1.msra.mxu0 %v477
      %597 = vmatprep.subr.mxu0 %v476
      %598 = vmatpush1.msra.mxu0 %v475
      %599 = vmatprep.subr.mxu0 0.0
      %600 = vmatpush2.msra.mxu0 0.0
      %601 = vmatprep.subr.mxu0 0.0
      %602 = vmatpush2.msra.mxu0 0.0
      %603 = vmatprep.subr.mxu0 0.0
      %604 = vmatpush2.msra.mxu0 0.0
      %605 = vmatprep.subr.mxu0 0.0
      %606 = vmatpush2.msra.mxu0 0.0
      %607 = vmatprep.subr.mxu0 0.0
      %608 = vmatpush2.msra.mxu0 0.0
      %609 = vmatprep.subr.mxu0 0.0
      %610 = vmatpush2.msra.mxu0 0.0
      %611 = vmatprep.subr.mxu0 0.0
      %612 = vmatpush2.msra.mxu0 0.0
      %613 = vmatprep.subr.mxu0 0.0
      %614 = vmatpush2.msra.mxu0 0.0
      %615 = vmatprep.subr.mxu0 0.0
      %616 = vmatpush2.msra.mxu0 0.0
      %617 = vmatprep.subr.mxu0 0.0
      %618 = vmatpush2.msra.mxu0 0.0
      %619 = vmatprep.subr.mxu0 0.0
      %620 = vmatpush2.msra.mxu0 0.0
      %621 = vmatprep.subr.mxu0 0.0
      %622 = vmatpush2.msra.mxu0 0.0
      %623 = vmatprep.subr.mxu0 0.0
      %624 = vmatpush2.msra.mxu0 0.0
      %625 = vmatprep.subr.mxu0 0.0
      %626 = vmatpush2.msra.mxu0 0.0
      %627 = vmatprep.subr.mxu0 0.0
      %628 = vmatpush2.msra.mxu0 0.0
      %629 = vmatprep.subr.mxu0 0.0
      %630 = vmatpush2.msra.mxu0 0.0
      %631 = vmatprep.mubr.f32.mxu0 0.0
      %632 = vmatmul.mubr.f32.gmra.mxu0 %v540
      %v633 = vpop.f32.mrf.mxu0
      %v634 = vadd.f32 %v506, %v633
      %v635 = vpop.f32.mrf.mxu0
      %v636 = vadd.f32 %v506, %v635
      %637 = vmatprep.mubr.f32.mxu0 0.0
      %638 = vmatmul.mubr.f32.gmra.mxu0 %v543
      %v639 = vpop.f32.mrf.mxu0
      %v640 = vadd.f32 %v511, %v639
      %v641 = vpop.f32.mrf.mxu0
      %v642 = vadd.f32 %v511, %v641
      %643 = vmatprep.mubr.f32.mxu0 0.0
      %644 = vmatmul.mubr.f32.gmra.mxu0 %v546
      %v645 = vpop.f32.mrf.mxu0
      %v646 = vadd.f32 %v516, %v645
      %v647 = vpop.f32.mrf.mxu0
      %v648 = vadd.f32 %v516, %v647
      %649 = vmatprep.mubr.f32.mxu0 0.0
      %650 = vmatmul.mubr.f32.gmra.mxu0 %v549
      %v651 = vpop.f32.mrf.mxu0
      %v652 = vadd.f32 %v521, %v651
      %v653 = vpop.f32.mrf.mxu0
      %v654 = vadd.f32 %v521, %v653
      %655 = vmatprep.mubr.f32.mxu0 0.0
      %656 = vmatmul.mubr.f32.gmra.mxu0 %v552
      %v657 = vpop.f32.mrf.mxu0
      %v658 = vadd.f32 %v526, %v657
      %v659 = vpop.f32.mrf.mxu0
      %v660 = vadd.f32 %v526, %v659
      %661 = vmatprep.mubr.f32.mxu0 0.0
      %662 = vmatmul.mubr.f32.gmra.mxu0 %v555
      %v663 = vpop.f32.mrf.mxu0
      %v664 = vadd.f32 %v531, %v663
      %v665 = vpop.f32.mrf.mxu0
      %v666 = vadd.f32 %v531, %v665
      %667 = vmatprep.mubr.f32.mxu0 0.0
      %668 = vmatmul.mubr.f32.gmra.mxu0 %v558
      %v669 = vpop.f32.mrf.mxu0
      %v670 = vadd.f32 %v536, %v669
      %v671 = vpop.f32.mrf.mxu0
      %v672 = vadd.f32 %v536, %v671
      %673 = vdwg.mxu0
      %v674 = vtanh.pop %v634
      %v675 = vtanh.pop %v636
      %v676 = vtanh.pop %v640
      %v677 = vtanh.pop %v642
      %v678 = vtanh.pop %v646
      %v679 = vtanh.pop %v648
      %v680 = vtanh.pop %v652
      %v681 = vtanh.pop %v654
      %v682 = vtanh.pop %v658
      %v683 = vtanh.pop %v660
      %v684 = vtanh.pop %v664
      %v685 = vtanh.pop %v666
      %v686 = vtanh.pop %v670
      %v687 = vtanh.pop %v672
      %v688 = vld [vmem:[%s5] sm:$0xff]
      %v689 = vld [vmem:[%s5 + $0x8] sm:$0xff]
      %v690 = vld [vmem:[%s5 + $0x10] sm:$0xff]
      %v691 = vld [vmem:[%s5 + $0x18] sm:$0xff]
      %v692 = vld [vmem:[%s5 + $0x20] sm:$0xff]
      %v693 = vld [vmem:[%s5 + $0x28] sm:$0xff]
      %v694 = vld [vmem:[%s5 + $0x30] sm:$0x3]
      %696 = vset.pattern.permute.xlu0 0
      %697 = vperm.xlu0 %696, %v688
      %v698 = vpop.permute.xlu0 %697
      %701 = vset.pattern.permute.xlu0 0
      %702 = vperm.xlu0 %701, %v689
      %v703 = vpop.permute.xlu0 %702
      %706 = vset.pattern.permute.xlu0 0
      %707 = vperm.xlu0 %706, %v690
      %v708 = vpop.permute.xlu0 %707
      %711 = vset.pattern.permute.xlu0 0
      %712 = vperm.xlu0 %711, %v691
      %v713 = vpop.permute.xlu0 %712
      %716 = vset.pattern.permute.xlu0 0
      %717 = vperm.xlu0 %716, %v692
      %v718 = vpop.permute.xlu0 %717
      %721 = vset.pattern.permute.xlu0 0
      %722 = vperm.xlu0 %721, %v693
      %v723 = vpop.permute.xlu0 %722
      %726 = vset.pattern.permute.xlu0 0
      %727 = vperm.xlu0 %726, %v694
      %v728 = vpop.permute.xlu0 %727
      %v730 = vmul.f32 %v698, %v674
      %v731 = vmul.f32 %v698, %v675
      %v732 = vmul.f32 %v703, %v676
      %v733 = vmul.f32 %v703, %v677
      %v734 = vmul.f32 %v708, %v678
      %v735 = vmul.f32 %v708, %v679
      %v736 = vmul.f32 %v713, %v680
      %v737 = vmul.f32 %v713, %v681
      %v738 = vmul.f32 %v718, %v682
      %v739 = vmul.f32 %v718, %v683
      %v740 = vmul.f32 %v723, %v684
      %v741 = vmul.f32 %v723, %v685
      %v742 = vmul.f32 %v728, %v686
      %v743 = vmul.f32 %v728, %v687
      %v744 = vadd.f32 %v730, %v732
      %v745 = vadd.f32 %v744, %v734
      %v746 = vadd.f32 %v745, %v736
      %v747 = vadd.f32 %v746, %v738
      %v748 = vadd.f32 %v747, %v740
      %v749 = vsel %vm560, %v742, 0.0
      %v750 = vadd.f32 %v748, %v749
      %v751 = vrot.slane %v750, 4
      %v752 = vadd.f32 %v750, %v751
      %v753 = vrot.slane %v752, 2
      %v754 = vadd.f32 %v752, %v753
      %v755 = vrot.slane %v754, 1
      %v756 = vadd.f32 %v754, %v755
      %v757 = vadd.f32 %v731, %v733
      %v758 = vadd.f32 %v757, %v735
      %v759 = vadd.f32 %v758, %v737
      %v760 = vadd.f32 %v759, %v739
      %v761 = vadd.f32 %v760, %v741
      %v762 = vsel %vm560, %v743, 0.0
      %v763 = vadd.f32 %v761, %v762
      %v764 = vrot.slane %v763, 4
      %v765 = vadd.f32 %v763, %v764
      %v766 = vrot.slane %v765, 2
      %v767 = vadd.f32 %v765, %v766
      %v768 = vrot.slane %v767, 1
      %v769 = vadd.f32 %v767, %v768
      %v770 = vld [vmem:[#allocation2] sm:$0x1]
      %772 = vset.pattern.permute.xlu0 0
      %773 = vperm.xlu0 %772, %v770
      %v774 = vpop.permute.xlu0 %773
      %v776 = vlaneseq
      %v777 = vshrl.u32 %v776, 7
      %v778 = vsub.s32 0, %v777
      %v779 = vrot.slane %v774, %v778
      %v780 = vadd.f32 %v756, %v779
      %v781 = vadd.f32 %v769, %v779
      %v784 = vcombine.low %v780, %v781
      %v786 = vunpack.c.l.s4 1966171168
      %v787 = vunpack.c.0.s8 %v786
      %v788 = vlaneseq
      %v789 = vshrl.u32 %v788, 7
      %v790 = vsub.s32 %v787, %v789
      %v791 = vrot.slane %v784, %v790
      %v793 = vunpack.c.l.s4 1966171168
      %v794 = vunpack.c.0.s8 %v793
      %v795 = vlaneseq
      %v796 = vshrl.u32 %v795, 7
      %v797 = vsub.s32 %v794, %v796
      %v798 = vrot.slane %v791, %v797
      %v800 = vlaneseq
      %vm801 = vcmp.ge.s32.totalorder %v800, 0
      %vm802 = vcmp.lt.s32.totalorder %v800, 256
      %vm803 = vmand %vm801, %vm802
      %804 = vst.msk [vmem:[%s280] sm:$0x3] %vm803, %v798
      %s805 = smul.u32 2, %s20
      %p806 = scmp.lt.s32.totalorder %s805, 3
      %s807 = scalar_select %p806, %s805, 3
      %s808 = scalar_lea.vmem %s7, %s807
      // Predicated region
      $region49: #{neural_net_pde_forward.1} parent=47 // pred_check
        %p809 = pneg %p190
      $region50: #{neural_net_pde_forward.1} parent=47 // pred_check_branch
        %811 = sbr.rel (%p809) target = $region52
      $region51: #{neural_net_pde_forward.1} parent=47 // pred_region
        %s812 = smul.u32 2, %s20
      $region52: #{neural_net_pde_forward.1} parent=47 // pred_fallthru
        _
    $region48: #{neural_net_pde_forward.1} parent=5 // pred_fallthru
      _
    %p813 = scmp.le.s32.totalorder 2, %s15
    // Predicated region
    $region53: #{neural_net_pde_forward.1} parent=5 // pred_check
      %p814 = pneg %p813
    $region54: #{neural_net_pde_forward.1} parent=5 // pred_check_branch
      %816 = sbr.rel (%p814) target = $region56
    $region55: #{neural_net_pde_forward.1} parent=5 // pred_region
      %s817 = ssub.s32 %s15, 2
      // Predicated region
      $region57: #{neural_net_pde_forward.1} parent=55 // pred_check
        %p818 = pneg %p196
      $region58: #{neural_net_pde_forward.1} parent=55 // pred_check_branch
        %820 = sbr.rel (%p818) target = $region60
      $region59: #{neural_net_pde_forward.1} parent=55 // pred_region
        %s821 = smul.u32 2, %s21
        %p822 = scmp.lt.s32.totalorder %s821, 3
        %s823 = scalar_select %p822, %s821, 3
        %s824 = scalar_lea.vmem %s7, %s823
      $region60: #{neural_net_pde_forward.1} parent=55 // pred_fallthru
        _
    $region56: #{neural_net_pde_forward.1} parent=5 // pred_fallthru
      _
  $region6: #{neural_net_pde_forward.1} parent=0 // loop_footer
    %s19 = sadd.s32 1, %s15
  $region7: #{neural_net_pde_forward.1} parent=0 // loop_footer_branch
    %14 = sbr.rel target = $region3
  $region8: #{neural_net_pde_forward.1} parent=0 // loop_exit
    _

</llo_original>
